<compile_context>
chip_gen: v6e
topology: v6e:2x2x1
jax: 0.10.0
libtpu: 0.0.40
codegen_flags: <defaults>
</compile_context>

<pallas_src>
import jax
import jax.numpy as jnp
from jax.experimental import pallas as pl
from jax.experimental.pallas import tpu as pltpu


def _broadcast_kernel(latents_ref, out_ref):
    # latents_ref: (1, F) latent row in VMEM (constant across grid steps).
    # out_ref:     (TB, F) lane-dense output tile for this batch block.
    # Sublane-replicating broadcast -> plain full-width stores on the way out.
    out_ref[...] = jnp.broadcast_to(latents_ref[...], out_ref.shape)


def perceiver_embeddings_forward(
    latents: jax.Array,
    batch_size: int,
    *,
    block_batch: int | None = None,
    vmem_limit_bytes: int = 32 * 1024 * 1024,
) -> jax.Array:
    """Broadcast (num, dim) latents to (batch_size, num, dim) via a Pallas kernel."""
    num, dim = latents.shape
    flat = num * dim
    itemsize = latents.dtype.itemsize

    # Lane-dense view of the latent table: one (1, num*dim) row.
    lat2d = latents.reshape(1, flat)

    if block_batch is None:
        latent_bytes = flat * itemsize
        # VMEM budget: the constant input is still (conservatively) counted as
        # double-buffered, plus ~2 MiB slack; split the rest over a
        # double-buffered output tile, capped at 8 MiB per buffer so the same
        # tiling is safe on v7x's smaller VMEM.
        avail = max(vmem_limit_bytes - 2 * latent_bytes - (2 << 20), 1 << 20)
        tile_bytes = min(avail // 2, 8 << 20)
        block_batch = max(1, tile_bytes // (flat * itemsize))

    if block_batch >= batch_size:
        # Single tile covering the whole batch (block dim == full array dim is legal).
        block_batch = batch_size
    else:
        # Partial-batch tiles must be sublane-aligned (multiple of 8).
        block_batch = max(8, (block_batch // 8) * 8)

    num_blocks = pl.cdiv(batch_size, block_batch)

    out2d = pl.pallas_call(
        _broadcast_kernel,
        out_shape=jax.ShapeDtypeStruct((batch_size, flat), latents.dtype),
        grid_spec=pltpu.PrefetchScalarGridSpec(
            num_scalar_prefetch=0,
            grid=(num_blocks,),
            # Same (1, F) latent row for every grid step (block index never changes,
            # so it is fetched once and revisited from VMEM).
            in_specs=[pl.BlockSpec((1, flat), lambda b: (0, 0))],
            # Each grid step writes a lane-dense (TB, F) slab of the output.
            out_specs=pl.BlockSpec((block_batch, flat), lambda b: (b, 0)),
        ),
        compiler_params=pltpu.CompilerParams(
            dimension_semantics=("parallel",),  # batch-block axis -> megacore shardable
            vmem_limit_bytes=vmem_limit_bytes,
        ),
    )(lat2d)

    # Row-major (batch, num*dim) == (batch, num, dim); reshape is free plumbing.
    return out2d.reshape(batch_size, num, dim)


class PerceiverEmbeddingsPallas:
    """JAX/Pallas port of PerceiverEmbeddings (deterministic synthetic init)."""

    def __init__(self, num: int, dim: int, freeze: bool = False, key=None):
        self.shape = (num, dim)
        # TODO(synk): `freeze` only gates requires_grad_ during training; no forward-pass effect.
        self.freeze = freeze
        if key is None:
            key = jax.random.PRNGKey(0)
        # torch.randn equivalent: standard normal init, deterministic via PRNGKey.
        self.latents = jax.random.normal(key, (num, dim), dtype=jnp.float32)

    def __call__(self, batch_size: int, scene=None, block_batch: int | None = None) -> jax.Array:
        return perceiver_embeddings_forward(
            self.latents, batch_size, block_batch=block_batch
        )


if __name__ == "__main__":
    key = jax.random.PRNGKey(0)

    # Small shapes consistent with the module config: num latents=8, latent dim=32.
    num_latents, latent_dim, batch_size = 8, 32, 2
    module = PerceiverEmbeddingsPallas(num_latents, latent_dim, freeze=False, key=key)

    # 1) Default path: single lane-dense tile covering the whole (tiny) batch.
    out = jax.block_until_ready(module(batch_size))
    ref = jnp.broadcast_to(
        module.latents[None, :, :], (batch_size, num_latents, latent_dim)
    )
    assert out.shape == (batch_size, num_latents, latent_dim), out.shape
    assert out.dtype == module.latents.dtype
    assert bool(jnp.array_equal(out, ref)), "mismatch vs reference broadcast"

    # 2) Exercise the multi-block path (batched batch rows + partial edge block).
    big_batch = 20
    out2 = jax.block_until_ready(module(big_batch, block_batch=8))
    ref2 = jnp.broadcast_to(
        module.latents[None, :, :], (big_batch, num_latents, latent_dim)
    )
    assert out2.shape == (big_batch, num_latents, latent_dim), out2.shape
    assert bool(jnp.array_equal(out2, ref2)), "mismatch vs reference broadcast (tiled)"

    print("KERNEL_OK")
</pallas_src>

<mosaic_0001>
module attributes {stable_mosaic.version = 11 : i64} {
  func.func @_broadcast_kernel(%arg0: i32, %arg1: memref<1x256xf32, #tpu.memory_space<vmem>>, %arg2: memref<2x256xf32, #tpu.memory_space<vmem>>) attributes {dimension_semantics = [#tpu.dimension_semantics<parallel>], iteration_bounds = array<i64: 1>, scalar_prefetch = 0 : i64, scratch_operands = 0 : i64, tpu.core_type = #tpu.core_type<tc>, window_params = [{pipeline_mode = #tpu.pipeline_mode<synchronous>, transform_indices = @transform_0, window_bounds = array<i64: 1, 256>}, {transform_indices = @transform_1, window_bounds = array<i64: 2, 256>}]} {
    %c0 = arith.constant 0 : index
    %c0_0 = arith.constant 0 : index
    %0 = vector.load %arg1[%c0, %c0_0] : memref<1x256xf32, #tpu.memory_space<vmem>>, vector<1x256xf32>
    %1 = vector.shape_cast %0 : vector<1x256xf32> to vector<1x256xf32>
    %2 = vector.broadcast %1 : vector<1x256xf32> to vector<2x256xf32>
    %c0_1 = arith.constant 0 : index
    %c0_2 = arith.constant 0 : index
    %3 = vector.load %arg2[%c0_1, %c0_2] : memref<2x256xf32, #tpu.memory_space<vmem>>, vector<2x256xf32>
    tpu.vector_store %arg2[%c0_1, %c0_2], %2 {strides = array<i32>} : memref<2x256xf32, #tpu.memory_space<vmem>>, vector<2x256xf32>,
    return
  }
  func.func @transform_0(%arg0: i32) -> (i32, i32) {
    %c0_i32 = arith.constant 0 : i32
    %c0_i32_0 = arith.constant 0 : i32
    %c0_i32_1 = arith.constant 0 : i32
    return %c0_i32, %c0_i32_0 : i32, i32
  }
  func.func @transform_1(%arg0: i32) -> (i32, i32) {
    %c0_i32 = arith.constant 0 : i32
    %c0_i32_0 = arith.constant 0 : i32
    return %arg0, %c0_i32 : i32, i32
  }
}

</mosaic_0001>

<llo_original>
// kernel: tpu_custom_call.1
$region0: #{tpu_custom_call.1}
  #allocation0 [shape = 'u32[]', space=smem, size = 0x4, offset = 0x4, fixed_abs, tag = 'smem constant byte address 0x4 - core index']
  #allocation1 [shape = 'u32[144,128]{1,0:T(1,128)}', space=vmem, size = 0x12000, scoped, tag = 'internal scratch']
  %s0 = inlined_call_operand.hbm [shape: f32[1,256], index: 0, kind: input, shape index: {}]
  %s1 = inlined_call_operand.hbm [shape: f32[2,256], index: 1, kind: output, shape index: {}]
  %s2 = sld [smem:[#allocation0]]
  $region18: #{tpu_custom_call.1} parent=0
    _
  %s4 = ssub.s32 1, %s2
  %s5 = scalar_select 0, %s4, %s2
  $region1: #{tpu_custom_call.1} parent=0
    #allocation2 [shape = 'u8[1024]{0}', space=vmem, size = 0x400, scoped, tag = 'input window, operand 0, single buffered']
    #allocation3 [shape = 's32[1]{0}', space=sflag, size = 0x4, scoped, tag = 'scoped memory for tpu_custom_call.1']
    #allocation4 [shape = 's32[1]{0}', space=sflag, size = 0x4, scoped, tag = 'scoped memory for tpu_custom_call.1']
    #allocation5 [shape = 'u8[2048]{0}', space=vmem, size = 0x800, scoped, tag = 'output window, operand 0, single buffered']
    %6 = vsyncpa [#allocation3], 0
    %7 = vsyncpa [#allocation4], 0
    // Predicated region
    $region2: #{tpu_custom_call.1} parent=1 // pred_check
      _
    $region3: #{tpu_custom_call.1} parent=1 // pred_check_branch
      %9 = sbr.rel (0) target = $region5
    $region4: #{tpu_custom_call.1} parent=1 // pred_region
      %s11 = ssub.s32 32, 32
      %12 = vsyncadd [#allocation3], %s11
      %s14 = sshll.u32 [#allocation2], 4
      %s15 = int_to_ptr.vmem [resolvable:$true] %s14
      %17 = dma.hbm_to_vmem [thread:$0]  %s0, 32, %s15, [#allocation3]
    $region5: #{tpu_custom_call.1} parent=1 // pred_fallthru
      _
    // Predicated region
    $region6: #{tpu_custom_call.1} parent=1 // pred_check
      _
    $region7: #{tpu_custom_call.1} parent=1 // pred_check_branch
      %19 = sbr.rel (0) target = $region9
    $region8: #{tpu_custom_call.1} parent=1 // pred_region
      %20 = dma.done [#allocation3], 32
    $region9: #{tpu_custom_call.1} parent=1 // pred_fallthru
      _
    %v21 = vld [vmem:[#allocation2] sm:$0x3]
    %v23 = vlaneseq
    %v24 = vshrl.u32 %v23, 7
    %v25 = vsub.s32 0, %v24
    %v26 = vrot.slane %v21, %v25
    %v27 = vlaneseq
    %v28 = vshrl.u32 %v27, 7
    %v29 = vsub.s32 1, %v28
    %v30 = vrot.slane %v21, %v29
    %v31 = vcombine.low %v26, %v30
    %v33 = vunpack.c.l.s4 1983009808
    %v34 = vunpack.c.0.s8 %v33
    %v35 = vlaneseq
    %v36 = vshrl.u32 %v35, 7
    %v37 = vsub.s32 %v34, %v36
    %v38 = vrot.slane %v31, %v37
    %40 = vst [vmem:[#allocation5] sm:$0xf] %v38
    // Predicated region
    $region10: #{tpu_custom_call.1} parent=1 // pred_check
      _
    $region11: #{tpu_custom_call.1} parent=1 // pred_check_branch
      %42 = sbr.rel (0) target = $region13
    $region12: #{tpu_custom_call.1} parent=1 // pred_region
      %s44 = ssub.s32 64, 64
      %45 = vsyncadd [#allocation4], %s44
      %s47 = sshll.u32 [#allocation5], 4
      %s48 = int_to_ptr.vmem [resolvable:$true] %s47
      %50 = dma.vmem_to_hbm [thread:$0]  %s48, 64, %s1, [#allocation4]
    $region13: #{tpu_custom_call.1} parent=1 // pred_fallthru
      _
    // Predicated region
    $region14: #{tpu_custom_call.1} parent=1 // pred_check
      _
    $region15: #{tpu_custom_call.1} parent=1 // pred_check_branch
      %52 = sbr.rel (0) target = $region17
    $region16: #{tpu_custom_call.1} parent=1 // pred_region
      %53 = dma.done [#allocation4], 64
    $region17: #{tpu_custom_call.1} parent=1 // pred_fallthru
      _
    %54 = vsyncpa [#allocation3], 1
    %55 = vsyncpa [#allocation4], 1

</llo_original>
